<compile_context>
chip_gen: v7x
topology: tpu7x:2x2x1
jax: 0.10.0
libtpu: 0.0.40
codegen_flags: <defaults>
</compile_context>

<pallas_src>
import jax
import jax.numpy as jnp
from jax.experimental import pallas as pl
from jax.experimental.pallas import tpu as pltpu


# --------------------------------------------------------------------------- #
# Kernel body: one fused multiply-add per vreg (VPU), cast to output dtype.
# Works for both layouts via broadcasting:
#   channel-tiled:  x (c_blk, w_blk) * scale (c_blk, 1)
#   fused:          x (n_blk, f_blk) * scale (1, f_blk)
# --------------------------------------------------------------------------- #
def _affine_kernel(scale_ref, shift_ref, x_ref, o_ref):
    o_ref[...] = (x_ref[...] * scale_ref[...] + shift_ref[...]).astype(o_ref.dtype)


# --------------------------------------------------------------------------- #
# Small helpers (pure Python ints).
# --------------------------------------------------------------------------- #
def _cdiv(a, b):
    return -(-a // b)


def _round_down(v, m):
    return (v // m) * m


def _round_up(v, m):
    return ((v + m - 1) // m) * m


def _tpu_generation():
    try:
        kind = jax.devices()[0].device_kind.lower()
    except Exception:
        return "unknown"
    if "v7" in kind or "7x" in kind:
        return "v7"
    if "v6" in kind:
        return "v6"
    if "v5" in kind:
        return "v5"
    return "unknown"


# (target data-tile bytes, vmem_limit ceiling) per generation.
#   v7x: 3.2 TB/s HBM makes per-step overhead costly -> bigger tiles, but VMEM
#        is only 64 MiB per TC -> cap the scoped limit at 56 MiB.
#   v6e: 4 MiB tiles; v5e: 2 MiB tiles (slower HBM, overhead already small).
_GEN_PARAMS = {
    "v7": (8 * 1024 * 1024, 56 * 1024 * 1024),
    "v6": (4 * 1024 * 1024, 112 * 1024 * 1024),
    "v5": (2 * 1024 * 1024, 112 * 1024 * 1024),
    "unknown": (2 * 1024 * 1024, 56 * 1024 * 1024),
}


def _pick_tile_2d(rows, cols, itemsize, sub, target_bytes):
    """Pick a (r_blk, c_blk) tile for a (rows, cols) array.

    Legality: r_blk is a multiple of `sub` (>= 8) or == rows; c_blk is a
    multiple of 128 or == cols.  Prefer full rows (contiguous HBM bursts);
    block the column axis only when a single minimal-row tile would exceed the
    byte target and the columns are 128-aligned.
    """
    lane = 128
    r_min = rows if rows <= sub else sub
    if cols % lane != 0 or r_min * cols * itemsize <= target_bytes:
        c_blk = cols
    else:
        c_blk = min(cols, max(lane, _round_down(target_bytes // (r_min * itemsize), lane)))
    r_blk = target_bytes // max(1, c_blk * itemsize)
    if r_blk >= rows or rows <= sub:
        r_blk = rows
    else:
        r_blk = max(sub, _round_down(r_blk, sub))
    return r_blk, c_blk


def _shrink_for_steps(r_blk, c_blk, rows, cols, extra_steps, itemsize, sub,
                      min_steps=8, min_tile_bytes=512 * 1024):
    """Split tiles further so the grid has enough steps for DMA/compute
    overlap (and so the v7x megacore can share the parallel axes), but never
    below ~512 KiB per tile so per-step overhead stays negligible."""
    lane = 128

    def steps(r, c):
        return extra_steps * _cdiv(rows, r) * _cdiv(cols, c)

    while steps(r_blk, c_blk) < min_steps:
        new_r = max(sub, _round_down(r_blk // 2, sub)) if r_blk > sub else r_blk
        if new_r < r_blk and new_r * c_blk * itemsize >= min_tile_bytes:
            r_blk = new_r
            continue
        new_c = (max(lane, _round_down(c_blk // 2, lane))
                 if (cols % lane == 0 and c_blk > lane) else c_blk)
        if new_c < c_blk and r_blk * new_c * itemsize >= min_tile_bytes:
            c_blk = new_c
            continue
        break
    return r_blk, c_blk


def _vmem_limit(data_tile_bytes, param_pad_bytes, ceiling):
    """Explicit scoped-VMEM limit from the real double-buffered footprint:
    2 buffers x (input tile + output tile) + 2 buffers x 2 lane-padded params,
    plus headroom for compiler-internal scratch."""
    footprint = 2 * (2 * data_tile_bytes) + 2 * 2 * param_pad_bytes
    headroom = max(4 * 1024 * 1024, footprint // 4)
    limit = max(16 * 1024 * 1024, footprint + headroom)
    return int(min(limit, ceiling))


# --------------------------------------------------------------------------- #
# Layout A: (N, C, H*W) channel-tiled (the common case, H*W reasonably large).
# --------------------------------------------------------------------------- #
def _channel_tiled_call(x, scale_c, shift_c, target_bytes, vmem_ceiling):
    N, C, H, W = x.shape
    cols = H * W
    itemsize = jnp.dtype(x.dtype).itemsize
    sub = max(8, 32 // itemsize)  # sublane packing: f32=8, bf16=16, int8=32

    c_blk, w_blk = _pick_tile_2d(C, cols, itemsize, sub, target_bytes)
    c_blk, w_blk = _shrink_for_steps(c_blk, w_blk, C, cols, N, itemsize, sub)

    x3 = x.reshape(N, C, cols)
    scale = scale_c.reshape(C, 1)
    shift = shift_c.reshape(C, 1)

    grid = (N, _cdiv(C, c_blk), _cdiv(cols, w_blk))

    # Leading N dim squeezed out of the kernel view; params indexed only by
    # the channel grid axis (reused across samples and spatial blocks).
    data_spec = pl.BlockSpec((None, c_blk, w_blk), lambda n, c, w: (n, c, w))
    param_spec = pl.BlockSpec((c_blk, 1), lambda n, c, w: (c, 0))

    limit = _vmem_limit(
        data_tile_bytes=c_blk * w_blk * itemsize,
        param_pad_bytes=_round_up(c_blk, 8) * 128 * 4,  # (c_blk,1) f32 pads to 128 lanes
        ceiling=vmem_ceiling,
    )

    out3 = pl.pallas_call(
        _affine_kernel,
        out_shape=jax.ShapeDtypeStruct((N, C, cols), x.dtype),
        grid=grid,
        in_specs=[param_spec, param_spec, data_spec],
        out_specs=data_spec,
        compiler_params=pltpu.CompilerParams(
            dimension_semantics=("parallel", "parallel", "parallel"),
            vmem_limit_bytes=limit,
        ),
    )(scale, shift, x3)
    return out3.reshape(N, C, H, W)


# --------------------------------------------------------------------------- #
# Layout B: fused (N, C*H*W) for tiny / lane-sparse spatial planes (< 512 B
# per row).  Broadcast (1, C*H*W) scale/shift is read once per column block
# and reused across the N axis (index_map ignores the row grid axis).
# --------------------------------------------------------------------------- #
def _fused_layout_call(x, scale_c, shift_c, target_bytes, vmem_ceiling):
    N, C, H, W = x.shape
    cols = H * W
    fused = C * cols
    itemsize = jnp.dtype(x.dtype).itemsize
    sub = max(8, 32 // itemsize)

    n_blk, f_blk = _pick_tile_2d(N, fused, itemsize, sub, target_bytes)
    n_blk, f_blk = _shrink_for_steps(n_blk, f_blk, N, fused, 1, itemsize, sub)

    x2 = x.reshape(N, fused)
    scale = jnp.repeat(scale_c, cols).reshape(1, fused)
    shift = jnp.repeat(shift_c, cols).reshape(1, fused)

    grid = (_cdiv(N, n_blk), _cdiv(fused, f_blk))
    data_spec = pl.BlockSpec((n_blk, f_blk), lambda i, j: (i, j))
    param_spec = pl.BlockSpec((1, f_blk), lambda i, j: (0, j))

    limit = _vmem_limit(
        data_tile_bytes=n_blk * f_blk * itemsize,
        param_pad_bytes=8 * _round_up(f_blk, 128) * 4,  # (1,f_blk) pads to 8 sublanes
        ceiling=vmem_ceiling,
    )

    out2 = pl.pallas_call(
        _affine_kernel,
        out_shape=jax.ShapeDtypeStruct((N, fused), x.dtype),
        grid=grid,
        in_specs=[param_spec, param_spec, data_spec],
        out_specs=data_spec,
        compiler_params=pltpu.CompilerParams(
            dimension_semantics=("parallel", "parallel"),
            vmem_limit_bytes=limit,
        ),
    )(scale, shift, x2)
    return out2.reshape(N, C, H, W)


# --------------------------------------------------------------------------- #
# Public wrapper: same semantics as torch FrozenBatchNorm2d.forward
# (batch_norm in eval mode with frozen running stats).
# --------------------------------------------------------------------------- #
def frozen_batch_norm_2d(x, running_mean, running_var, weight, bias, eps=1e-5):
    """x: (N, C, H, W); running_mean/var/weight/bias: (C,)."""
    N, C, H, W = x.shape
    cols = H * W
    itemsize = jnp.dtype(x.dtype).itemsize

    gen = _tpu_generation()
    target_bytes, vmem_ceiling = _GEN_PARAMS[gen]

    # Fold the frozen statistics into a per-channel affine (f32 for accuracy).
    var_f = running_var.astype(jnp.float32)
    mean_f = running_mean.astype(jnp.float32)
    scale_c = weight.astype(jnp.float32) * jax.lax.rsqrt(var_f + jnp.float32(eps))
    shift_c = bias.astype(jnp.float32) - mean_f * scale_c

    if cols * itemsize < 512:
        return _fused_layout_call(x, scale_c, shift_c, target_bytes, vmem_ceiling)
    return _channel_tiled_call(x, scale_c, shift_c, target_bytes, vmem_ceiling)


# --------------------------------------------------------------------------- #
# Self-test.
# --------------------------------------------------------------------------- #
def _reference(x, mean, var, weight, bias, eps):
    return ((x - mean[None, :, None, None])
            / jnp.sqrt(var[None, :, None, None] + eps)
            * weight[None, :, None, None]
            + bias[None, :, None, None])


if __name__ == "__main__":
    key = jax.random.PRNGKey(0)
    k_x, k_m, k_v, k_w, k_b, k_x2 = jax.random.split(key, 6)
    eps = 1e-5

    # Primary shape: channel-tiled (lane-dense) path.
    N, C, H, W = 2, 4, 16, 16
    x = jax.random.normal(k_x, (N, C, H, W), dtype=jnp.float32)
    running_mean = jax.random.normal(k_m, (C,), dtype=jnp.float32)
    running_var = jax.random.uniform(k_v, (C,), minval=0.5, maxval=1.5, dtype=jnp.float32)
    weight = jax.random.normal(k_w, (C,), dtype=jnp.float32)
    bias = jax.random.normal(k_b, (C,), dtype=jnp.float32)

    out = frozen_batch_norm_2d(x, running_mean, running_var, weight, bias, eps)
    out = jax.block_until_ready(out)
    ref = _reference(x, running_mean, running_var, weight, bias, eps)
    assert out.shape == x.shape and out.dtype == x.dtype
    assert jnp.allclose(out, ref, atol=1e-5, rtol=1e-5)

    # Secondary shape: tiny 7x7 plane exercises the fused (N, C*H*W) path.
    x_s = jax.random.normal(k_x2, (2, 4, 7, 7), dtype=jnp.float32)
    out_s = frozen_batch_norm_2d(x_s, running_mean, running_var, weight, bias, eps)
    out_s = jax.block_until_ready(out_s)
    ref_s = _reference(x_s, running_mean, running_var, weight, bias, eps)
    assert out_s.shape == x_s.shape and out_s.dtype == x_s.dtype
    assert jnp.allclose(out_s, ref_s, atol=1e-5, rtol=1e-5)

    print("KERNEL_OK")
</pallas_src>

<mosaic_0001>
module attributes {stable_mosaic.version = 11 : i64} {
  func.func @_affine_kernel(%arg0: i32, %arg1: i32, %arg2: i32, %arg3: memref<4x1xf32, #tpu.memory_space<vmem>>, %arg4: memref<4x1xf32, #tpu.memory_space<vmem>>, %arg5: memref<1x4x256xf32, #tpu.memory_space<vmem>>, %arg6: memref<1x4x256xf32, #tpu.memory_space<vmem>>) attributes {dimension_semantics = [#tpu.dimension_semantics<parallel>, #tpu.dimension_semantics<parallel>, #tpu.dimension_semantics<parallel>], iteration_bounds = array<i64: 2, 1, 1>, scalar_prefetch = 0 : i64, scratch_operands = 0 : i64, tpu.core_type = #tpu.core_type<tc>, window_params = [{transform_indices = @transform_0, window_bounds = array<i64: 4, 1>}, {transform_indices = @transform_1, window_bounds = array<i64: 4, 1>}, {transform_indices = @transform_2, window_bounds = array<i64: 1, 4, 256>}, {transform_indices = @transform_3, window_bounds = array<i64: 1, 4, 256>}]} {
    %c0 = arith.constant 0 : index
    %c0_0 = arith.constant 0 : index
    %c0_1 = arith.constant 0 : index
    %0 = vector.load %arg5[%c0, %c0_0, %c0_1] : memref<1x4x256xf32, #tpu.memory_space<vmem>>, vector<1x4x256xf32>
    %1 = vector.shape_cast %0 : vector<1x4x256xf32> to vector<4x256xf32>
    %c0_2 = arith.constant 0 : index
    %c0_3 = arith.constant 0 : index
    %2 = vector.load %arg3[%c0_2, %c0_3] : memref<4x1xf32, #tpu.memory_space<vmem>>, vector<4x1xf32>
    %3 = vector.broadcast %2 : vector<4x1xf32> to vector<4x256xf32>
    %4 = arith.mulf %1, %3 : vector<4x256xf32>
    %c0_4 = arith.constant 0 : index
    %c0_5 = arith.constant 0 : index
    %5 = vector.load %arg4[%c0_4, %c0_5] : memref<4x1xf32, #tpu.memory_space<vmem>>, vector<4x1xf32>
    %6 = vector.broadcast %5 : vector<4x1xf32> to vector<4x256xf32>
    %7 = arith.addf %4, %6 : vector<4x256xf32>
    %c0_6 = arith.constant 0 : index
    %c0_7 = arith.constant 0 : index
    %c0_8 = arith.constant 0 : index
    %8 = vector.load %arg6[%c0_6, %c0_7, %c0_8] : memref<1x4x256xf32, #tpu.memory_space<vmem>>, vector<1x4x256xf32>
    %9 = vector.shape_cast %8 : vector<1x4x256xf32> to vector<4x256xf32>
    %10 = vector.shape_cast %7 : vector<4x256xf32> to vector<1x4x256xf32>
    tpu.vector_store %arg6[%c0_6, %c0_7, %c0_8], %10 {strides = array<i32>} : memref<1x4x256xf32, #tpu.memory_space<vmem>>, vector<1x4x256xf32>,
    return
  }
  func.func @transform_0(%arg0: i32, %arg1: i32, %arg2: i32) -> (i32, i32) {
    %c0_i32 = arith.constant 0 : i32
    %c0_i32_0 = arith.constant 0 : i32
    return %arg1, %c0_i32 : i32, i32
  }
  func.func @transform_1(%arg0: i32, %arg1: i32, %arg2: i32) -> (i32, i32) {
    %c0_i32 = arith.constant 0 : i32
    %c0_i32_0 = arith.constant 0 : i32
    return %arg1, %c0_i32 : i32, i32
  }
  func.func @transform_2(%arg0: i32, %arg1: i32, %arg2: i32) -> (i32, i32, i32) {
    %c0_i32 = arith.constant 0 : i32
    return %arg0, %arg1, %arg2 : i32, i32, i32
  }
  func.func @transform_3(%arg0: i32, %arg1: i32, %arg2: i32) -> (i32, i32, i32) {
    %c0_i32 = arith.constant 0 : i32
    return %arg0, %arg1, %arg2 : i32, i32, i32
  }
}

</mosaic_0001>

<llo_original>
// kernel: tpu_custom_call.1
$region0: #{tpu_custom_call.1}
  #allocation0 [shape = 'u32[]', space=smem, size = 0x4, offset = 0x4, fixed_abs, tag = 'smem constant byte address 0x4 - core index']
  #allocation1 [shape = 'u32[144,128]{1,0:T(1,128)}', space=vmem, size = 0x12000, scoped, tag = 'internal scratch']
  %s0 = inlined_call_operand.vmem [shape: f32[4,1], index: 0, kind: input, shape index: {}]
  %s1 = inlined_call_operand.vmem [shape: f32[4,1], index: 1, kind: input, shape index: {}]
  %s2 = inlined_call_operand.vmem [shape: f32[2,4,256], index: 2, kind: input, shape index: {}]
  %s3 = inlined_call_operand.hbm [shape: f32[2,4,256], index: 3, kind: output, shape index: {}]
  %s4 = sld [smem:[#allocation0]]
  $region45: #{tpu_custom_call.1} parent=0
    _
  %s6 = ssub.s32 1, %s4
  %s7 = scalar_select 0, %s6, %s4
  $region1: #{tpu_custom_call.1} parent=0
    #allocation2 [shape = 'u8[8192]{0}', space=vmem, size = 0x2000, scoped, tag = 'output window, operand 0']
    #allocation3 [shape = 's32[2]{0}', space=sflag, size = 0x8, scoped, tag = 'scoped memory for tpu_custom_call.1']
    %8 = vsyncpa [#allocation3], 0
    %s9 = scalar_lea.sflag [#allocation3], 1
    %10 = vsyncpa %s9, 0
    loop: start=0, step=1, limit=4
    $region2: #{tpu_custom_call.1} parent=1 // loop_pre_header
      _
    $region3: #{tpu_custom_call.1} parent=1 // loop_header
      %s12 = sphi 0, %s16
      %p13 = scmp.ge.s32.totalorder %s12, 4
      %s19 = sphi 0, %s38
      %s20 = sphi 0, %s34
      %s21 = sphi 0, %s30
      %s22 = sphi 0, %s19
      %s23 = sphi 0, %s20
      %s24 = sphi 0, %s21
      %s25 = sphi 0, %s22
      %s26 = sphi 0, %s23
      %s27 = sphi 0, %s24
      %s41 = sphi 0, %s43
      %s44 = sphi 0, %s41
      %s45 = sphi 0, %s44
      %s61 = sphi 0, %s45
      %s67 = sphi 0, %s69
      %s70 = sphi 0, %s67
      %s71 = sphi 0, %s70
      %s87 = sphi 0, %s71
      %s97 = sphi 0, %s99
      %s100 = sphi 0, %s97
      %s101 = sphi 0, %s100
      %s117 = sphi 0, %s101
      %s127 = sphi 0, %s129
      %s130 = sphi 0, %s127
      %s131 = sphi 0, %s130
      %s147 = sphi 0, %s131
    $region4: #{tpu_custom_call.1} parent=1 // loop_header_branch
      %15 = sbr.rel (%p13) target = $region8
    $region5: #{tpu_custom_call.1} parent=1 // loop_body
      %s17 = ssub.s32 %s12, 1
      %s18 = ssub.s32 %s12, 2
      %s28 = sadd.s32 1, %s21
      %p29 = scmp.ge.s32.totalorder %s28, 1
      %s30 = scalar_select %p29, 0, %s28
      %s31 = sadd.s32 1, %s20
      %s32 = scalar_select %p29, %s31, %s20
      %p33 = scmp.ge.s32.totalorder %s32, 1
      %s34 = scalar_select %p33, 0, %s32
      %s35 = sadd.s32 1, %s19
      %s36 = scalar_select %p33, %s35, %s19
      %p37 = scmp.ge.s32.totalorder %s36, 2
      %s38 = scalar_select %p37, 0, %s36
      %s39 = ssub.s32 %s20, %s34
      %p40 = scmp.eq.s32.totalorder %s39, 0
      %s42 = sadd.s32 %s41, 1
      %s43 = scalar_select %p40, %s41, %s42
      %p46 = pneg %p40
      %p47 = scmp.eq.s32.totalorder %s12, 1
      %p48 = por %p46, %p47
      %p49 = scmp.ne.s32.totalorder %s41, %s44
      %p50 = scmp.eq.s32.totalorder %s12, 0
      %p51 = por %p49, %p50
      %p52 = scmp.ne.s32.totalorder %s41, %s44
      %p53 = scmp.eq.s32.totalorder %s17, 1
      %p54 = por %p52, %p53
      %p55 = scmp.ne.s32.totalorder %s44, %s45
      %p56 = scmp.eq.s32.totalorder %s17, 0
      %p57 = por %p55, %p56
      %p58 = scmp.ne.s32.totalorder %s44, %s45
      %p59 = scmp.eq.s32.totalorder %s18, 1
      %p60 = por %p58, %p59
      %p62 = scmp.ne.s32.totalorder %s45, %s61
      %p63 = scmp.eq.s32.totalorder %s18, 0
      %p64 = por %p62, %p63
      %s65 = ssub.s32 %s20, %s34
      %p66 = scmp.eq.s32.totalorder %s65, 0
      %s68 = sadd.s32 %s67, 1
      %s69 = scalar_select %p66, %s67, %s68
      %p72 = pneg %p66
      %p73 = scmp.eq.s32.totalorder %s12, 1
      %p74 = por %p72, %p73
      %p75 = scmp.ne.s32.totalorder %s67, %s70
      %p76 = scmp.eq.s32.totalorder %s12, 0
      %p77 = por %p75, %p76
      %p78 = scmp.ne.s32.totalorder %s67, %s70
      %p79 = scmp.eq.s32.totalorder %s17, 1
      %p80 = por %p78, %p79
      %p81 = scmp.ne.s32.totalorder %s70, %s71
      %p82 = scmp.eq.s32.totalorder %s17, 0
      %p83 = por %p81, %p82
      %p84 = scmp.ne.s32.totalorder %s70, %s71
      %p85 = scmp.eq.s32.totalorder %s18, 1
      %p86 = por %p84, %p85
      %p88 = scmp.ne.s32.totalorder %s71, %s87
      %p89 = scmp.eq.s32.totalorder %s18, 0
      %p90 = por %p88, %p89
      %s91 = ssub.s32 %s19, %s38
      %s92 = ssub.s32 %s20, %s34
      %s93 = sor.u32 %s91, %s92
      %s94 = ssub.s32 %s21, %s30
      %s95 = sor.u32 %s93, %s94
      %p96 = scmp.eq.s32.totalorder %s95, 0
      %s98 = sadd.s32 %s97, 1
      %s99 = scalar_select %p96, %s97, %s98
      %p102 = pneg %p96
      %p103 = scmp.eq.s32.totalorder %s12, 1
      %p104 = por %p102, %p103
      %p105 = scmp.ne.s32.totalorder %s97, %s100
      %p106 = scmp.eq.s32.totalorder %s12, 0
      %p107 = por %p105, %p106
      %p108 = scmp.ne.s32.totalorder %s97, %s100
      %p109 = scmp.eq.s32.totalorder %s17, 1
      %p110 = por %p108, %p109
      %p111 = scmp.ne.s32.totalorder %s100, %s101
      %p112 = scmp.eq.s32.totalorder %s17, 0
      %p113 = por %p111, %p112
      %p114 = scmp.ne.s32.totalorder %s100, %s101
      %p115 = scmp.eq.s32.totalorder %s18, 1
      %p116 = por %p114, %p115
      %p118 = scmp.ne.s32.totalorder %s101, %s117
      %p119 = scmp.eq.s32.totalorder %s18, 0
      %p120 = por %p118, %p119
      %s121 = ssub.s32 %s19, %s38
      %s122 = ssub.s32 %s20, %s34
      %s123 = sor.u32 %s121, %s122
      %s124 = ssub.s32 %s21, %s30
      %s125 = sor.u32 %s123, %s124
      %p126 = scmp.eq.s32.totalorder %s125, 0
      %s128 = sadd.s32 %s127, 1
      %s129 = scalar_select %p126, %s127, %s128
      %p132 = pneg %p126
      %p133 = scmp.eq.s32.totalorder %s12, 1
      %p134 = por %p132, %p133
      %p135 = scmp.ne.s32.totalorder %s127, %s130
      %p136 = scmp.eq.s32.totalorder %s12, 0
      %p137 = por %p135, %p136
      %p138 = scmp.ne.s32.totalorder %s127, %s130
      %p139 = scmp.eq.s32.totalorder %s17, 1
      %p140 = por %p138, %p139
      %p141 = scmp.ne.s32.totalorder %s130, %s131
      %p142 = scmp.eq.s32.totalorder %s17, 0
      %p143 = por %p141, %p142
      %p144 = scmp.ne.s32.totalorder %s130, %s131
      %p145 = scmp.eq.s32.totalorder %s18, 1
      %p146 = por %p144, %p145
      %p148 = scmp.ne.s32.totalorder %s131, %s147
      %p149 = scmp.eq.s32.totalorder %s18, 0
      %p150 = por %p148, %p149
      %p151 = scmp.le.s32.totalorder 1, %s12
      %p152 = scmp.lt.s32.totalorder %s12, 3
      %p153 = pnand %p151, %p152
      %p154 = pneg %p153
      // Predicated region
      $region9: #{tpu_custom_call.1} parent=5 // pred_check
        _
      $region10: #{tpu_custom_call.1} parent=5 // pred_check_branch
        %156 = sbr.rel (%p153) target = $region12
      $region11: #{tpu_custom_call.1} parent=5 // pred_region
        %s157 = ssub.s32 %s12, 1
        // Predicated region
        $region13: #{tpu_custom_call.1} parent=11 // pred_check
          %p158 = pneg %p57
        $region14: #{tpu_custom_call.1} parent=11 // pred_check_branch
          %160 = sbr.rel (%p158) target = $region16
        $region15: #{tpu_custom_call.1} parent=11 // pred_region
          %p161 = scmp.lt.s32.totalorder %s23, 0
          %s162 = scalar_select %p161, %s23, 0
          %s163 = smul.addr %s162, 4
          %s164 = scalar_lea.vmem %s0, %s163
        $region16: #{tpu_custom_call.1} parent=11 // pred_fallthru
          _
        // Predicated region
        $region17: #{tpu_custom_call.1} parent=11 // pred_check
          %p165 = pneg %p83
        $region18: #{tpu_custom_call.1} parent=11 // pred_check_branch
          %167 = sbr.rel (%p165) target = $region20
        $region19: #{tpu_custom_call.1} parent=11 // pred_region
          %p168 = scmp.lt.s32.totalorder %s23, 0
          %s169 = scalar_select %p168, %s23, 0
          %s170 = smul.addr %s169, 4
          %s171 = scalar_lea.vmem %s1, %s170
        $region20: #{tpu_custom_call.1} parent=11 // pred_fallthru
          _
      $region12: #{tpu_custom_call.1} parent=5 // pred_fallthru
        _
      %p172 = scmp.lt.s32.totalorder %s12, 2
      // Predicated region
      $region21: #{tpu_custom_call.1} parent=5 // pred_check
        %p173 = pneg %p172
      $region22: #{tpu_custom_call.1} parent=5 // pred_check_branch
        %175 = sbr.rel (%p173) target = $region24
      $region23: #{tpu_custom_call.1} parent=5 // pred_region
        // Predicated region
        $region25: #{tpu_custom_call.1} parent=23 // pred_check
          %p176 = pneg %p107
        $region26: #{tpu_custom_call.1} parent=23 // pred_check_branch
          %178 = sbr.rel (%p176) target = $region28
        $region27: #{tpu_custom_call.1} parent=23 // pred_region
          %s179 = smul.u32 2, %s21
          %p180 = scmp.lt.s32.totalorder %s19, 1
          %s181 = scalar_select %p180, %s19, 1
          %p182 = scmp.lt.s32.totalorder %s20, 0
          %s183 = scalar_select %p182, %s20, 0
          %p184 = scmp.lt.s32.totalorder %s179, 1
          %s185 = scalar_select %p184, %s179, 1
          %s186 = smul.addr %s183, 2
          %s187 = sadd.s32 %s185, %s186
          %s188 = smul.addr %s181, 2
          %s189 = sadd.s32 %s187, %s188
          %s190 = smul.addr %s189, 4
          %s191 = scalar_lea.vmem %s2, %s190
          %s192 = smul.u32 2, %s21
        $region28: #{tpu_custom_call.1} parent=23 // pred_fallthru
          _
      $region24: #{tpu_custom_call.1} parent=5 // pred_fallthru
        _
      %p193 = scmp.le.s32.totalorder 1, %s12
      %p194 = scmp.lt.s32.totalorder %s12, 3
      %p195 = pnand %p193, %p194
      %p196 = pneg %p195
      // Predicated region
      $region29: #{tpu_custom_call.1} parent=5 // pred_check
        _
      $region30: #{tpu_custom_call.1} parent=5 // pred_check_branch
        %198 = sbr.rel (%p195) target = $region32
      $region31: #{tpu_custom_call.1} parent=5 // pred_region
        %s199 = ssub.s32 %s12, 1
        %p200 = scmp.lt.s32.totalorder %s23, 0
        %s201 = scalar_select %p200, %s23, 0
        %s202 = smul.addr %s201, 4
        %s203 = scalar_lea.vmem %s0, %s202
        %p204 = pneg %p57
        %p205 = pneg %p54
        %p206 = scmp.lt.s32.totalorder %s23, 0
        %s207 = scalar_select %p206, %s23, 0
        %s208 = smul.addr %s207, 4
        %s209 = scalar_lea.vmem %s1, %s208
        %p210 = pneg %p83
        %p211 = pneg %p80
        %s212 = smul.u32 2, %s24
        %p213 = scmp.lt.s32.totalorder %s22, 1
        %s214 = scalar_select %p213, %s22, 1
        %p215 = scmp.lt.s32.totalorder %s23, 0
        %s216 = scalar_select %p215, %s23, 0
        %p217 = scmp.lt.s32.totalorder %s212, 1
        %s218 = scalar_select %p217, %s212, 1
        %s219 = smul.addr %s216, 2
        %s220 = sadd.s32 %s218, %s219
        %s221 = smul.addr %s214, 2
        %s222 = sadd.s32 %s220, %s221
        %s223 = smul.addr %s222, 4
        %s224 = scalar_lea.vmem %s2, %s223
        %p225 = pneg %p113
        %p226 = pneg %p110
        %p227 = pneg %p143
        %p228 = pneg %p140
        %s229 = sand.u32 %s130, 1
        %s230 = scalar_lea.sflag [#allocation3], %s229
        %s231 = sand.u32 %s130, 1
        %s232 = smul.addr %s231, 8
        %s233 = scalar_lea.vmem [#allocation2], %s232
        %p234 = scmp.lt.s32.totalorder %s23, 0
        %s235 = scalar_select %p234, %s23, 0
        %s236 = smul.addr %s235, 4
        %s237 = scalar_lea.vmem %s0, %s236
        %p238 = scmp.lt.s32.totalorder %s23, 0
        %s239 = scalar_select %p238, %s23, 0
        %s240 = smul.addr %s239, 4
        %s241 = scalar_lea.vmem %s1, %s240
        %s242 = smul.u32 2, %s24
        %p243 = scmp.lt.s32.totalorder %s22, 1
        %s244 = scalar_select %p243, %s22, 1
        %p245 = scmp.lt.s32.totalorder %s23, 0
        %s246 = scalar_select %p245, %s23, 0
        %p247 = scmp.lt.s32.totalorder %s242, 1
        %s248 = scalar_select %p247, %s242, 1
        %s249 = smul.addr %s246, 2
        %s250 = sadd.s32 %s248, %s249
        %s251 = smul.addr %s244, 2
        %s252 = sadd.s32 %s250, %s251
        %s253 = smul.addr %s252, 4
        %s254 = scalar_lea.vmem %s2, %s253
        %s255 = smul.u32 2, %s24
        %s256 = smul.u32 2, %s24
        %v257 = vld [vmem:[%s254] sm:$0xff]
        %v258 = vld [vmem:[%s237] sm:$0xf]
        %260 = vset.pattern.permute.xlu0 0
        %261 = vperm.xlu0 %260, %v258
        %v262 = vpop.permute.xlu0 %261
        %v264 = vunpack.c.l.s4 839922192
        %v265 = vunpack.c.0.s8 %v264
        %v266 = vlaneseq
        %v267 = vshrl.u32 %v266, 7
        %v268 = vsub.s32 %v265, %v267
        %v269 = vrot.slane %v262, %v268
        %v271 = vmul.f32 %v257, %v269
        %v272 = vld [vmem:[%s241] sm:$0xf]
        %274 = vset.pattern.permute.xlu0 0
        %275 = vperm.xlu0 %274, %v272
        %v276 = vpop.permute.xlu0 %275
        %v278 = vunpack.c.l.s4 839922192
        %v279 = vunpack.c.0.s8 %v278
        %v280 = vlaneseq
        %v281 = vshrl.u32 %v280, 7
        %v282 = vsub.s32 %v279, %v281
        %v283 = vrot.slane %v276, %v282
        %v285 = vadd.f32 %v271, %v283
        %286 = vst [vmem:[%s233] sm:$0xff] %v285
        %s287 = sand.u32 %s130, 1
        %s288 = scalar_lea.sflag [#allocation3], %s287
        %s289 = sand.u32 %s130, 1
        %s290 = smul.addr %s289, 8
        %s291 = scalar_lea.vmem [#allocation2], %s290
        // Predicated region
        $region33: #{tpu_custom_call.1} parent=31 // pred_check
          %p292 = pneg %p140
        $region34: #{tpu_custom_call.1} parent=31 // pred_check_branch
          %294 = sbr.rel (%p292) target = $region36
        $region35: #{tpu_custom_call.1} parent=31 // pred_region
          %s295 = smul.u32 2, %s24
          %s297 = ssub.s32 128, 128
          %298 = vsyncadd %s288, %s297
          %s299 = smul.addr %s23, 2
          %s300 = sadd.s32 %s295, %s299
          %s301 = smul.addr %s22, 2
          %s302 = sadd.s32 %s300, %s301
          %s303 = smul.addr %s302, 64
          %s304 = scalar_lea.hbm %s3, %s303
          %s306 = sshll.u32 %s291, 4
          %s307 = int_to_ptr.vmem [resolvable:$true] %s306
          %309 = dma.vmem_to_hbm [thread:$0]  %s307, 128, %s304, %s288
        $region36: #{tpu_custom_call.1} parent=31 // pred_fallthru
          _
      $region32: #{tpu_custom_call.1} parent=5 // pred_fallthru
        _
      %p310 = scmp.le.s32.totalorder 2, %s12
      // Predicated region
      $region37: #{tpu_custom_call.1} parent=5 // pred_check
        %p311 = pneg %p310
      $region38: #{tpu_custom_call.1} parent=5 // pred_check_branch
        %313 = sbr.rel (%p311) target = $region40
      $region39: #{tpu_custom_call.1} parent=5 // pred_region
        %s314 = ssub.s32 %s12, 2
        // Predicated region
        $region41: #{tpu_custom_call.1} parent=39 // pred_check
          %p315 = pneg %p146
        $region42: #{tpu_custom_call.1} parent=39 // pred_check_branch
          %317 = sbr.rel (%p315) target = $region44
        $region43: #{tpu_custom_call.1} parent=39 // pred_region
          %s318 = sand.u32 %s131, 1
          %s319 = scalar_lea.sflag [#allocation3], %s318
          %s320 = sand.u32 %s131, 1
          %s321 = smul.addr %s320, 8
          %s322 = scalar_lea.vmem [#allocation2], %s321
          %323 = dma.done %s319, 128
        $region44: #{tpu_custom_call.1} parent=39 // pred_fallthru
          _
      $region40: #{tpu_custom_call.1} parent=5 // pred_fallthru
        _
    $region6: #{tpu_custom_call.1} parent=1 // loop_footer
      %s16 = sadd.s32 1, %s12
    $region7: #{tpu_custom_call.1} parent=1 // loop_footer_branch
      %11 = sbr.rel target = $region3
    $region8: #{tpu_custom_call.1} parent=1 // loop_exit
      _
    %324 = vsyncpa [#allocation3], 1
    %s325 = scalar_lea.sflag [#allocation3], 1
    %326 = vsyncpa %s325, 1

</llo_original>
